<compile_context>
chip_gen: v6e
topology: v6e:2x2x1
jax: 0.10.0
libtpu: 0.0.40
codegen_flags: <defaults>
</compile_context>

<pallas_src>
import functools

import jax
import jax.numpy as jnp
from jax.experimental import pallas as pl
from jax.experimental.pallas import tpu as pltpu

NUM_CLASSES = 16          # stand-in for config.NUM_CLASSES
APPLY_SOFTMAX = True      # ClassificationModel(apply_softmax=True)

LANE = 128


def _round_up(x, m):
    return (x + m - 1) // m * m


def _vmem_capacity_bytes():
    """Physical VMEM of the local TPU; conservative (v7x, 64 MiB) fallback."""
    try:
        info = pltpu.get_tpu_info()
        cap = getattr(info, "vmem_capacity_bytes", None)
        if cap:
            return int(cap)
    except Exception:
        pass
    return 64 * 1024 * 1024


def _choose_tiles(R, HW, itemsize, x_buf_budget):
    """Pick (row_tile, hw_tile) for the (R, HW) global-average-pool input."""
    sublane = {4: 8, 2: 16, 1: 32}.get(itemsize, 8)
    min_tr = R if R <= sublane else sublane

    if min_tr * HW * itemsize <= x_buf_budget:
        # Full-HW (fully contiguous) tiles: single reduction step per row tile.
        thw = HW
        if R <= sublane:
            tr = R
        else:
            tr = (x_buf_budget // (HW * itemsize)) // sublane * sublane
            tr = max(sublane, min(tr, _round_up(R, sublane)))
            if pl.cdiv(R, tr) < 2:            # keep both v7x TensorCores busy
                tr = max(sublane, _round_up(pl.cdiv(R, 2), sublane))
    else:
        # HW too large for one buffer: 2-D grid with lane-aligned HW chunks.
        tr = min_tr
        thw = (x_buf_budget // (max(tr, 1) * itemsize)) // LANE * LANE
        thw = max(LANE, min(thw, _round_up(HW, LANE)))
    return tr, thw


def _gap_kernel(x_ref, out_ref, *, hw_total, hw_tile, single_k):
    # x_ref:   (TR, THW)  producer dtype
    # out_ref: (TR, 1)    f32 row sums (resident across the reduction axis)
    xblk = x_ref[...].astype(jnp.float32)
    if single_k:
        out_ref[...] = jnp.sum(xblk, axis=-1, keepdims=True)
        return

    k = pl.program_id(1)
    if hw_total % hw_tile != 0:
        # Mask the ragged tail of the last HW tile (no host-side padding of x).
        col = jax.lax.broadcasted_iota(jnp.int32, xblk.shape, 1)
        xblk = jnp.where(col < (hw_total - k * hw_tile), xblk, 0.0)

    @pl.when(k == 0)
    def _init():
        out_ref[...] = jnp.zeros_like(out_ref)

    out_ref[...] += jnp.sum(xblk, axis=-1, keepdims=True)


def _head_kernel(pooled_ref, w_ref, b_ref, out_ref):
    # pooled_ref: (Bp, C) f32 row sums; w_ref: (C, 128) f32 (mean folded, pad=0)
    # b_ref: (1, 128) f32;              out_ref: (Bp, 128) f32 lane-dense
    logits = jnp.dot(pooled_ref[...], w_ref[...],
                     preferred_element_type=jnp.float32) + b_ref[...]
    if APPLY_SOFTMAX:
        col = jax.lax.broadcasted_iota(jnp.int32, logits.shape, 1)
        masked = jnp.where(col < NUM_CLASSES, logits, -jnp.inf)
        m = jnp.max(masked, axis=-1, keepdims=True)
        e = jnp.exp(masked - m)
        out_ref[...] = e / jnp.sum(e, axis=-1, keepdims=True)
    else:
        out_ref[...] = logits


def classification_model_forward(x_nchw, w, b):
    """x_nchw: (B, C, H, W); w: (C, NUM_CLASSES); b: (NUM_CLASSES,).
    Returns (B, NUM_CLASSES) f32 (softmax over classes if APPLY_SOFTMAX)."""
    B, C, H, W = x_nchw.shape
    HW = H * W
    R = B * C
    itemsize = jnp.dtype(x_nchw.dtype).itemsize

    # ---- per-generation VMEM budget ----
    cap = _vmem_capacity_bytes()
    if cap <= 64 * 1024 * 1024:            # v7x: 64 MiB physical per TensorCore
        x_buf_budget = 16 * 1024 * 1024
        vmem_cap = 44 * 1024 * 1024
    else:                                   # v5e / v6e: 128 MiB physical
        x_buf_budget = 24 * 1024 * 1024
        vmem_cap = 72 * 1024 * 1024

    tr, thw = _choose_tiles(R, HW, itemsize, x_buf_budget)
    n_rows = pl.cdiv(R, tr)
    n_hw = pl.cdiv(HW, thw)

    # ---- stage 1: global-average-pool row sums (HBM-bound) ----
    x2d = x_nchw.reshape(R, HW)            # metadata-only; no cast, no pad
    x_tile_bytes = tr * thw * itemsize
    vmem_limit = int(min(vmem_cap, 2 * x_tile_bytes + 4 * 1024 * 1024))

    gap = functools.partial(_gap_kernel, hw_total=HW, hw_tile=thw,
                            single_k=(n_hw == 1))
    row_sums = pl.pallas_call(
        gap,
        out_shape=jax.ShapeDtypeStruct((R, 1), jnp.float32),
        grid_spec=pltpu.PrefetchScalarGridSpec(
            num_scalar_prefetch=0,
            grid=(n_rows, n_hw),
            in_specs=[pl.BlockSpec((tr, thw), lambda i, k: (i, k))],
            out_specs=pl.BlockSpec((tr, 1), lambda i, k: (i, 0)),
        ),
        compiler_params=pltpu.CompilerParams(
            dimension_semantics=("parallel", "arbitrary"),
            vmem_limit_bytes=vmem_limit,
        ),
    )(x2d)

    # ---- stage 2: linear head + masked softmax (tiny, single step) ----
    w_scaled = w.astype(jnp.float32) / float(HW)             # fold 1/(H*W) into w
    w_pad = jnp.zeros((C, LANE), jnp.float32).at[:, :NUM_CLASSES].set(w_scaled)
    b_pad = jnp.zeros((1, LANE), jnp.float32).at[0, :NUM_CLASSES].set(
        b.astype(jnp.float32))

    pooled = row_sums.reshape(B, C)
    B_pad = _round_up(B, 8)                                   # sublane-aligned rows
    if B_pad != B:
        pooled = jnp.zeros((B_pad, C), jnp.float32).at[:B].set(pooled)

    out = pl.pallas_call(
        _head_kernel,
        out_shape=jax.ShapeDtypeStruct((B_pad, LANE), jnp.float32),
    )(pooled, w_pad, b_pad)

    return out[:B, :NUM_CLASSES]


# TODO(synk): the pretrained timm backbones (efficientnetv2 / convnext / swin / vit)
# are not reproducible in a single Pallas kernel; a GAP + linear head stands in.

if __name__ == "__main__":
    key = jax.random.PRNGKey(0)
    kx, kw, kb = jax.random.split(key, 3)

    B, C, H, W = 2, 4, 16, 16
    x = jax.random.normal(kx, (B, C, H, W), dtype=jnp.float32)
    w = jax.random.normal(kw, (C, NUM_CLASSES), dtype=jnp.float32) * 0.1
    b = jax.random.normal(kb, (NUM_CLASSES,), dtype=jnp.float32) * 0.01

    out = classification_model_forward(x, w, b)
    out = jax.block_until_ready(out)

    # pure-JAX reference (f32 throughout)
    pooled_ref = jnp.mean(x, axis=(2, 3))
    logits_ref = pooled_ref @ w + b
    ref = jax.nn.softmax(logits_ref, axis=1) if APPLY_SOFTMAX else logits_ref

    assert out.shape == (B, NUM_CLASSES)
    assert jnp.allclose(jnp.sum(out, axis=1), 1.0, atol=1e-4)
    assert jnp.allclose(out, ref, atol=1e-3)
    print("KERNEL_OK")
</pallas_src>

<mosaic_0001>
module attributes {stable_mosaic.version = 11 : i64} {
  func.func @_gap_kernel(%arg0: i32, %arg1: i32, %arg2: memref<8x256xf32, #tpu.memory_space<vmem>>, %arg3: memref<8x1xf32, #tpu.memory_space<vmem>>) attributes {dimension_semantics = [#tpu.dimension_semantics<parallel>, #tpu.dimension_semantics<arbitrary>], iteration_bounds = array<i64: 1, 1>, scalar_prefetch = 0 : i64, scratch_operands = 0 : i64, tpu.core_type = #tpu.core_type<tc>, window_params = [{transform_indices = @transform_0, window_bounds = array<i64: 8, 256>}, {transform_indices = @transform_1, window_bounds = array<i64: 8, 1>}]} {
    %c0 = arith.constant 0 : index
    %c0_0 = arith.constant 0 : index
    %0 = vector.load %arg2[%c0, %c0_0] : memref<8x256xf32, #tpu.memory_space<vmem>>, vector<8x256xf32>
    %cst = arith.constant dense<0.000000e+00> : vector<8xf32>
    %1 = vector.multi_reduction <add>, %0, %cst [1] : vector<8x256xf32> to vector<8xf32>
    %2 = vector.shape_cast %1 : vector<8xf32> to vector<8x1xf32>
    %c0_1 = arith.constant 0 : index
    %c0_2 = arith.constant 0 : index
    %3 = vector.load %arg3[%c0_1, %c0_2] : memref<8x1xf32, #tpu.memory_space<vmem>>, vector<8x1xf32>
    tpu.vector_store %arg3[%c0_1, %c0_2], %2 {strides = array<i32>} : memref<8x1xf32, #tpu.memory_space<vmem>>, vector<8x1xf32>,
    return
  }
  func.func @transform_0(%arg0: i32, %arg1: i32) -> (i32, i32) {
    %c0_i32 = arith.constant 0 : i32
    return %arg0, %arg1 : i32, i32
  }
  func.func @transform_1(%arg0: i32, %arg1: i32) -> (i32, i32) {
    %c0_i32 = arith.constant 0 : i32
    %c0_i32_0 = arith.constant 0 : i32
    return %arg0, %c0_i32 : i32, i32
  }
}

</mosaic_0001>

<llo_original>
// kernel: tpu_custom_call.1
$region0: #{tpu_custom_call.1}
  #allocation0 [shape = 'u32[]', space=smem, size = 0x4, offset = 0x4, fixed_abs, tag = 'smem constant byte address 0x4 - core index']
  #allocation1 [shape = 'u32[144,128]{1,0:T(1,128)}', space=vmem, size = 0x12000, scoped, tag = 'internal scratch']
  %s0 = inlined_call_operand.hbm [shape: f32[8,256], index: 0, kind: input, shape index: {}]
  %s1 = inlined_call_operand.vmem [shape: f32[8,1], index: 1, kind: output, shape index: {}]
  %s2 = sld [smem:[#allocation0]]
  $region18: #{tpu_custom_call.1} parent=0
    _
  %s4 = ssub.s32 1, %s2
  %s5 = scalar_select 0, %s4, %s2
  $region1: #{tpu_custom_call.1} parent=0
    #allocation2 [shape = 'u8[8192]{0}', space=vmem, size = 0x2000, scoped, tag = 'input window, operand 0, single buffered']
    #allocation3 [shape = 's32[1]{0}', space=sflag, size = 0x4, scoped, tag = 'scoped memory for tpu_custom_call.1']
    %6 = vsyncpa [#allocation3], 0
    // Predicated region
    $region2: #{tpu_custom_call.1} parent=1 // pred_check
      _
    $region3: #{tpu_custom_call.1} parent=1 // pred_check_branch
      %8 = sbr.rel (0) target = $region5
    $region4: #{tpu_custom_call.1} parent=1 // pred_region
      %s10 = ssub.s32 256, 256
      %11 = vsyncadd [#allocation3], %s10
      %s13 = sshll.u32 [#allocation2], 4
      %s14 = int_to_ptr.vmem [resolvable:$true] %s13
      %16 = dma.hbm_to_vmem [thread:$0]  %s0, 256, %s14, [#allocation3]
    $region5: #{tpu_custom_call.1} parent=1 // pred_fallthru
      _
    // Predicated region
    $region6: #{tpu_custom_call.1} parent=1 // pred_check
      _
    $region7: #{tpu_custom_call.1} parent=1 // pred_check_branch
      %18 = sbr.rel (0) target = $region9
    $region8: #{tpu_custom_call.1} parent=1 // pred_region
      %19 = dma.done [#allocation3], 256
    $region9: #{tpu_custom_call.1} parent=1 // pred_fallthru
      _
    %v20 = vld [vmem:[#allocation2] sm:$0xff]
    %v21 = vld [vmem:[#allocation2 + $0x8] sm:$0xff]
    %v22 = vadd.f32 %v20, %v21
    %23 = vadd.xlane.f32.xlu0 %v22
    %v24 = vpop.xlane.xlu0 %23
    %vm25 = vcmask 7168
    %26 = vst.msk [vmem:[%s1] sm:$0xff] %vm25, %v24
    // Predicated region
    $region10: #{tpu_custom_call.1} parent=1 // pred_check
      _
    $region11: #{tpu_custom_call.1} parent=1 // pred_check_branch
      %28 = sbr.rel (0) target = $region13
    $region12: #{tpu_custom_call.1} parent=1 // pred_region
      _
    $region13: #{tpu_custom_call.1} parent=1 // pred_fallthru
      _
    // Predicated region
    $region14: #{tpu_custom_call.1} parent=1 // pred_check
      _
    $region15: #{tpu_custom_call.1} parent=1 // pred_check_branch
      %30 = sbr.rel (0) target = $region17
    $region16: #{tpu_custom_call.1} parent=1 // pred_region
      _
    $region17: #{tpu_custom_call.1} parent=1 // pred_fallthru
      _
    %31 = vsyncpa [#allocation3], 1

</llo_original>
